<compile_context>
chip_gen: v7x
topology: tpu7x:2x2x1
jax: 0.10.0
libtpu: 0.0.40
codegen_flags: <defaults>
</compile_context>

<pallas_src>
import functools

import jax
import jax.numpy as jnp
from jax.experimental import pallas as pl
from jax.experimental.pallas import tpu as pltpu


def mlp_kernel(x_ref, w1_ref, b1_ref, w2_ref, b2_ref, w3_ref, b3_ref, o_ref):
    # x_ref: (9, TILE_B) float32 -- batch on the lane axis.
    x = x_ref[...]

    # fc1 + ReLU : (16, 9) @ (9, T) -> (16, T)
    h1 = jnp.dot(w1_ref[...], x, preferred_element_type=jnp.float32) + b1_ref[...]
    h1 = jnp.maximum(h1, 0.0)

    # fc2 + ReLU : (8, 16) @ (16, T) -> (8, T)
    h2 = jnp.dot(w2_ref[...], h1, preferred_element_type=jnp.float32) + b2_ref[...]
    h2 = jnp.maximum(h2, 0.0)

    # fc3 + Sigmoid : (1, 8) @ (8, T) -> (1, T)  -- lane-dense output store.
    h3 = jnp.dot(w3_ref[...], h2, preferred_element_type=jnp.float32) + b3_ref[...]
    o_ref[...] = jax.nn.sigmoid(h3)


def _round_up(n, m):
    return ((n + m - 1) // m) * m


@functools.partial(jax.jit, static_argnames=("tile_b",))
def net_forward(x, params, tile_b=4096):
    """x: (B, 9) float32. params: PyTorch-layout weights (out,in) / biases (out,1).
    Returns (B, 1) float32."""
    w1, b1, w2, b2, w3, b3 = (params["w1"], params["b1"], params["w2"],
                              params["b2"], params["w3"], params["b3"])
    B, F = x.shape

    # Batch tiles sit on the lane axis -> multiples of 128.
    tile = min(tile_b, _round_up(B, 128))
    b_pad = _round_up(B, tile)

    # Transpose + zero-pad in the wrapper so every in-kernel access is lane-dense.
    x_t = jnp.zeros((F, b_pad), jnp.float32).at[:, :B].set(x.T)

    resident = pl.BlockSpec(memory_space=pltpu.MemorySpace.VMEM)  # weights stay in VMEM
    out_t = pl.pallas_call(
        mlp_kernel,
        out_shape=jax.ShapeDtypeStruct((1, b_pad), jnp.float32),
        grid=(b_pad // tile,),
        in_specs=[
            pl.BlockSpec((F, tile), lambda i: (0, i)),   # x tile, auto-pipelined
            resident, resident,                          # w1, b1
            resident, resident,                          # w2, b2
            resident, resident,                          # w3, b3
        ],
        out_specs=pl.BlockSpec((1, tile), lambda i: (0, i)),
        compiler_params=pltpu.CompilerParams(
            dimension_semantics=("parallel",)),          # v7x: 2 TCs share the batch
    )(x_t, w1, b1, w2, b2, w3, b3)

    return out_t[:, :B].T                                # (B, 1)


def init_params(key):
    """Deterministic synthetic init matching nn.Linear (out_features, in_features)."""
    ks = jax.random.split(key, 6)

    def unif(k, shape, fan_in):
        bound = 1.0 / jnp.sqrt(fan_in)
        return jax.random.uniform(k, shape, jnp.float32, -bound, bound)

    return {
        "w1": unif(ks[0], (16, 9), 9),   "b1": unif(ks[1], (16, 1), 9),
        "w2": unif(ks[2], (8, 16), 16),  "b2": unif(ks[3], (8, 1), 16),
        "w3": unif(ks[4], (1, 8), 8),    "b3": unif(ks[5], (1, 1), 8),
    }


def net_forward_ref(x, p):
    h1 = jnp.maximum(x @ p["w1"].T + p["b1"].T, 0.0)
    h2 = jnp.maximum(h1 @ p["w2"].T + p["b2"].T, 0.0)
    return jax.nn.sigmoid(h2 @ p["w3"].T + p["b3"].T)


if __name__ == "__main__":
    key = jax.random.PRNGKey(0)
    k_x, k_p = jax.random.split(key)
    params = init_params(k_p)

    # Small shape consistent with the module: batch=8, 9 input features.
    batch = 8
    x = jax.random.normal(k_x, (batch, 9), dtype=jnp.float32)

    out = jax.block_until_ready(net_forward(x, params))
    ref = net_forward_ref(x, params)
    assert out.shape == (batch, 1)
    assert jnp.allclose(out, ref, atol=1e-5, rtol=1e-5)

    # Also exercise the multi-tile pipelined path (grid > 1, ragged batch).
    batch2 = 300
    x2 = jax.random.normal(k_x, (batch2, 9), dtype=jnp.float32)
    out2 = jax.block_until_ready(net_forward(x2, params, tile_b=128))
    assert out2.shape == (batch2, 1)
    assert jnp.allclose(out2, net_forward_ref(x2, params), atol=1e-5, rtol=1e-5)

    print("KERNEL_OK")
</pallas_src>

<mosaic_0001>
module attributes {stable_mosaic.version = 11 : i64} {
  func.func @mlp_kernel(%arg0: i32, %arg1: memref<9x128xf32, #tpu.memory_space<vmem>>, %arg2: memref<16x9xf32, #tpu.memory_space<vmem>>, %arg3: memref<16x1xf32, #tpu.memory_space<vmem>>, %arg4: memref<8x16xf32, #tpu.memory_space<vmem>>, %arg5: memref<8x1xf32, #tpu.memory_space<vmem>>, %arg6: memref<1x8xf32, #tpu.memory_space<vmem>>, %arg7: memref<1x1xf32, #tpu.memory_space<vmem>>, %arg8: memref<1x128xf32, #tpu.memory_space<vmem>>) attributes {dimension_semantics = [#tpu.dimension_semantics<parallel>], iteration_bounds = array<i64: 1>, scalar_prefetch = 0 : i64, scratch_operands = 0 : i64, tpu.core_type = #tpu.core_type<tc>, window_params = [{transform_indices = @transform_0, window_bounds = array<i64: 9, 128>}, {pipeline_mode = #tpu.pipeline_mode<synchronous>, transform_indices = @transform_1, window_bounds = array<i64: 16, 9>}, {pipeline_mode = #tpu.pipeline_mode<synchronous>, transform_indices = @transform_2, window_bounds = array<i64: 16, 1>}, {pipeline_mode = #tpu.pipeline_mode<synchronous>, transform_indices = @transform_3, window_bounds = array<i64: 8, 16>}, {pipeline_mode = #tpu.pipeline_mode<synchronous>, transform_indices = @transform_4, window_bounds = array<i64: 8, 1>}, {pipeline_mode = #tpu.pipeline_mode<synchronous>, transform_indices = @transform_5, window_bounds = array<i64: 1, 8>}, {pipeline_mode = #tpu.pipeline_mode<synchronous>, transform_indices = @transform_6, window_bounds = array<i64: 1, 1>}, {transform_indices = @transform_7, window_bounds = array<i64: 1, 128>}]} {
    %c0 = arith.constant 0 : index
    %c0_0 = arith.constant 0 : index
    %0 = vector.load %arg1[%c0, %c0_0] : memref<9x128xf32, #tpu.memory_space<vmem>>, vector<9x128xf32>
    %c0_1 = arith.constant 0 : index
    %c0_2 = arith.constant 0 : index
    %1 = vector.load %arg2[%c0_1, %c0_2] : memref<16x9xf32, #tpu.memory_space<vmem>>, vector<16x9xf32>
    %cst = arith.constant dense<0.000000e+00> : vector<16x128xf32>
    %2 = tpu.matmul %1, %0, %cst {dimension_numbers = #tpu.dot_dimension_numbers<[1], [0], [0], [1], [0, 0, 1, 1], [], []>} : vector<16x9xf32>, vector<9x128xf32>, vector<16x128xf32> -> vector<16x128xf32>
    %c0_3 = arith.constant 0 : index
    %c0_4 = arith.constant 0 : index
    %3 = vector.load %arg3[%c0_3, %c0_4] : memref<16x1xf32, #tpu.memory_space<vmem>>, vector<16x1xf32>
    %4 = vector.broadcast %3 : vector<16x1xf32> to vector<16x128xf32>
    %5 = arith.addf %2, %4 : vector<16x128xf32>
    %cst_5 = arith.constant 0.000000e+00 : f32
    %6 = vector.broadcast %cst_5 : f32 to vector<16x128xf32>
    %7 = arith.maximumf %5, %6 : vector<16x128xf32>
    %c0_6 = arith.constant 0 : index
    %c0_7 = arith.constant 0 : index
    %8 = vector.load %arg4[%c0_6, %c0_7] : memref<8x16xf32, #tpu.memory_space<vmem>>, vector<8x16xf32>
    %cst_8 = arith.constant dense<0.000000e+00> : vector<8x128xf32>
    %9 = tpu.matmul %8, %7, %cst_8 {dimension_numbers = #tpu.dot_dimension_numbers<[1], [0], [0], [1], [0, 0, 1, 1], [], []>} : vector<8x16xf32>, vector<16x128xf32>, vector<8x128xf32> -> vector<8x128xf32>
    %c0_9 = arith.constant 0 : index
    %c0_10 = arith.constant 0 : index
    %10 = vector.load %arg5[%c0_9, %c0_10] : memref<8x1xf32, #tpu.memory_space<vmem>>, vector<8x1xf32>
    %11 = vector.broadcast %10 : vector<8x1xf32> to vector<8x128xf32>
    %12 = arith.addf %9, %11 : vector<8x128xf32>
    %cst_11 = arith.constant 0.000000e+00 : f32
    %13 = vector.broadcast %cst_11 : f32 to vector<8x128xf32>
    %14 = arith.maximumf %12, %13 : vector<8x128xf32>
    %c0_12 = arith.constant 0 : index
    %c0_13 = arith.constant 0 : index
    %15 = vector.load %arg6[%c0_12, %c0_13] : memref<1x8xf32, #tpu.memory_space<vmem>>, vector<1x8xf32>
    %cst_14 = arith.constant dense<0.000000e+00> : vector<1x128xf32>
    %16 = tpu.matmul %15, %14, %cst_14 {dimension_numbers = #tpu.dot_dimension_numbers<[1], [0], [0], [1], [0, 0, 1, 1], [], []>} : vector<1x8xf32>, vector<8x128xf32>, vector<1x128xf32> -> vector<1x128xf32>
    %c0_15 = arith.constant 0 : index
    %c0_16 = arith.constant 0 : index
    %17 = vector.load %arg7[%c0_15, %c0_16] : memref<1x1xf32, #tpu.memory_space<vmem>>, vector<1x1xf32>
    %18 = vector.broadcast %17 : vector<1x1xf32> to vector<1x128xf32>
    %19 = arith.addf %16, %18 : vector<1x128xf32>
    %20 = arith.negf %19 : vector<1x128xf32>
    %21 = math.exp %20 : vector<1x128xf32>
    %cst_17 = arith.constant 1.000000e+00 : f32
    %22 = vector.broadcast %cst_17 : f32 to vector<1x128xf32>
    %23 = arith.addf %22, %21 : vector<1x128xf32>
    %24 = arith.divf %22, %23 : vector<1x128xf32>
    %c0_18 = arith.constant 0 : index
    %c0_19 = arith.constant 0 : index
    %25 = vector.load %arg8[%c0_18, %c0_19] : memref<1x128xf32, #tpu.memory_space<vmem>>, vector<1x128xf32>
    tpu.vector_store %arg8[%c0_18, %c0_19], %24 {strides = array<i32>} : memref<1x128xf32, #tpu.memory_space<vmem>>, vector<1x128xf32>,
    return
  }
  func.func @transform_0(%arg0: i32) -> (i32, i32) {
    %c0_i32 = arith.constant 0 : i32
    %c0_i32_0 = arith.constant 0 : i32
    return %c0_i32, %arg0 : i32, i32
  }
  func.func @transform_1(%arg0: i32) -> (i32, i32) {
    %c0_i32 = arith.constant 0 : i32
    %c0_i32_0 = arith.constant 0 : i32
    %c0_i32_1 = arith.constant 0 : i32
    return %c0_i32, %c0_i32_0 : i32, i32
  }
  func.func @transform_2(%arg0: i32) -> (i32, i32) {
    %c0_i32 = arith.constant 0 : i32
    %c0_i32_0 = arith.constant 0 : i32
    %c0_i32_1 = arith.constant 0 : i32
    return %c0_i32, %c0_i32_0 : i32, i32
  }
  func.func @transform_3(%arg0: i32) -> (i32, i32) {
    %c0_i32 = arith.constant 0 : i32
    %c0_i32_0 = arith.constant 0 : i32
    %c0_i32_1 = arith.constant 0 : i32
    return %c0_i32, %c0_i32_0 : i32, i32
  }
  func.func @transform_4(%arg0: i32) -> (i32, i32) {
    %c0_i32 = arith.constant 0 : i32
    %c0_i32_0 = arith.constant 0 : i32
    %c0_i32_1 = arith.constant 0 : i32
    return %c0_i32, %c0_i32_0 : i32, i32
  }
  func.func @transform_5(%arg0: i32) -> (i32, i32) {
    %c0_i32 = arith.constant 0 : i32
    %c0_i32_0 = arith.constant 0 : i32
    %c0_i32_1 = arith.constant 0 : i32
    return %c0_i32, %c0_i32_0 : i32, i32
  }
  func.func @transform_6(%arg0: i32) -> (i32, i32) {
    %c0_i32 = arith.constant 0 : i32
    %c0_i32_0 = arith.constant 0 : i32
    %c0_i32_1 = arith.constant 0 : i32
    return %c0_i32, %c0_i32_0 : i32, i32
  }
  func.func @transform_7(%arg0: i32) -> (i32, i32) {
    %c0_i32 = arith.constant 0 : i32
    %c0_i32_0 = arith.constant 0 : i32
    return %c0_i32, %arg0 : i32, i32
  }
}

</mosaic_0001>

<llo_original>
// kernel: net_forward.1
$region0: #{net_forward.1}
  #allocation0 [shape = 'u32[]', space=smem, size = 0x4, offset = 0x4, fixed_abs, tag = 'smem constant byte address 0x4 - core index']
  #allocation1 [shape = 'u32[144,128]{1,0:T(1,128)}', space=vmem, size = 0x12000, scoped, tag = 'internal scratch']
  #allocation2 [shape = 'f32[1,1]{1,0:T(1,128)S(1)}', space=vmem, size = 0x200, scoped, tag = 'scoped memory for net_forward.1']
  %s0 = inlined_call_operand.vmem [shape: f32[9,128], index: 0, kind: input, shape index: {}]
  %s1 = inlined_call_operand.vmem [shape: f32[16,9], index: 1, kind: input, shape index: {}]
  %s2 = inlined_call_operand.vmem [shape: f32[16,1], index: 2, kind: input, shape index: {}]
  %s3 = inlined_call_operand.vmem [shape: f32[8,16], index: 3, kind: input, shape index: {}]
  %s4 = inlined_call_operand.vmem [shape: f32[8,1], index: 4, kind: input, shape index: {}]
  %s5 = inlined_call_operand.vmem [shape: f32[1,8], index: 5, kind: input, shape index: {}]
  %s6 = inlined_call_operand.<no memory space> [shape: f32[1,1], index: 6, kind: input, shape index: {}]
  %s7 = inlined_call_operand.vmem [shape: f32[1,128], index: 7, kind: output, shape index: {}]
  %s8 = sld [smem:[#allocation0]]
  $region38: #{net_forward.1} parent=0
    _
  %s10 = ssub.s32 1, %s8
  %s11 = scalar_select 0, %s10, %s8
  %v12 = vstv %s6
  %13 = vst [vmem:[#allocation2] sm:$0x1] %v12
  // Predicated region
  $region2: #{net_forward.1} parent=0 // pred_check
    _
  $region3: #{net_forward.1} parent=0 // pred_check_branch
    %15 = sbr.rel (0) target = $region5
  $region4: #{net_forward.1} parent=0 // pred_region
    _
  $region5: #{net_forward.1} parent=0 // pred_fallthru
    _
  // Predicated region
  $region6: #{net_forward.1} parent=0 // pred_check
    _
  $region7: #{net_forward.1} parent=0 // pred_check_branch
    %17 = sbr.rel (0) target = $region9
  $region8: #{net_forward.1} parent=0 // pred_region
    _
  $region9: #{net_forward.1} parent=0 // pred_fallthru
    _
  // Predicated region
  $region10: #{net_forward.1} parent=0 // pred_check
    _
  $region11: #{net_forward.1} parent=0 // pred_check_branch
    %19 = sbr.rel (0) target = $region13
  $region12: #{net_forward.1} parent=0 // pred_region
    _
  $region13: #{net_forward.1} parent=0 // pred_fallthru
    _
  // Predicated region
  $region14: #{net_forward.1} parent=0 // pred_check
    _
  $region15: #{net_forward.1} parent=0 // pred_check_branch
    %21 = sbr.rel (0) target = $region17
  $region16: #{net_forward.1} parent=0 // pred_region
    _
  $region17: #{net_forward.1} parent=0 // pred_fallthru
    _
  // Predicated region
  $region18: #{net_forward.1} parent=0 // pred_check
    _
  $region19: #{net_forward.1} parent=0 // pred_check_branch
    %23 = sbr.rel (0) target = $region21
  $region20: #{net_forward.1} parent=0 // pred_region
    _
  $region21: #{net_forward.1} parent=0 // pred_fallthru
    _
  // Predicated region
  $region22: #{net_forward.1} parent=0 // pred_check
    _
  $region23: #{net_forward.1} parent=0 // pred_check_branch
    %25 = sbr.rel (0) target = $region25
  $region24: #{net_forward.1} parent=0 // pred_region
    _
  $region25: #{net_forward.1} parent=0 // pred_fallthru
    _
  // Predicated region
  $region26: #{net_forward.1} parent=0 // pred_check
    _
  $region27: #{net_forward.1} parent=0 // pred_check_branch
    %27 = sbr.rel (0) target = $region29
  $region28: #{net_forward.1} parent=0 // pred_region
    _
  $region29: #{net_forward.1} parent=0 // pred_fallthru
    _
  %v28 = vld [vmem:[%s0] sm:$0xff]
  %v29 = vld [vmem:[%s0 + $0x8] sm:$0x1]
  %v30 = vld [vmem:[%s1] sm:$0xff]
  %v31 = vld [vmem:[%s1 + $0x8] sm:$0xff]
  %v32 = vld [vmem:[%s2] sm:$0xff]
  %v33 = vld [vmem:[%s2 + $0x8] sm:$0xff]
  %35 = vset.pattern.permute.xlu0 0
  %36 = vperm.xlu0 %35, %v32
  %v37 = vpop.permute.xlu0 %36
  %40 = vset.pattern.permute.xlu0 0
  %41 = vperm.xlu0 %40, %v33
  %v42 = vpop.permute.xlu0 %41
  %vm44 = vcmask 72704
  %v46 = vsel %vm44, %v30, 0
  %v49 = vsel %vm44, %v31, 0
  %vm51 = vcmask 1040384
  %v53 = vsel %vm51, %v29, 0
  %55 = vmatprep.subr.mxu0 0.0
  %56 = vmatpush1.msra.mxu0 %v28
  %57 = vmatprep.subr.mxu0 0.0
  %58 = vmatpush1.msra.mxu0 %v53
  %59 = vmatprep.subr.mxu0 0.0
  %60 = vmatpush1.msra.mxu0 0.0
  %61 = vmatprep.subr.mxu0 0.0
  %62 = vmatpush1.msra.mxu0 0.0
  %63 = vmatprep.subr.mxu0 0.0
  %64 = vmatpush1.msra.mxu0 0.0
  %65 = vmatprep.subr.mxu0 0.0
  %66 = vmatpush1.msra.mxu0 0.0
  %67 = vmatprep.subr.mxu0 0.0
  %68 = vmatpush1.msra.mxu0 0.0
  %69 = vmatprep.subr.mxu0 0.0
  %70 = vmatpush1.msra.mxu0 0.0
  %71 = vmatprep.subr.mxu0 0.0
  %72 = vmatpush1.msra.mxu0 0.0
  %73 = vmatprep.subr.mxu0 0.0
  %74 = vmatpush1.msra.mxu0 0.0
  %75 = vmatprep.subr.mxu0 0.0
  %76 = vmatpush1.msra.mxu0 0.0
  %77 = vmatprep.subr.mxu0 0.0
  %78 = vmatpush1.msra.mxu0 0.0
  %79 = vmatprep.subr.mxu0 0.0
  %80 = vmatpush1.msra.mxu0 0.0
  %81 = vmatprep.subr.mxu0 0.0
  %82 = vmatpush1.msra.mxu0 0.0
  %83 = vmatprep.subr.mxu0 0.0
  %84 = vmatpush1.msra.mxu0 0.0
  %85 = vmatprep.subr.mxu0 0.0
  %86 = vmatpush1.msra.mxu0 0.0
  %87 = vmatprep.subr.mxu0 0.0
  %88 = vmatpush1.msra.mxu0 0.0
  %89 = vmatprep.subr.mxu0 0.0
  %90 = vmatpush1.msra.mxu0 0.0
  %91 = vmatprep.subr.mxu0 0.0
  %92 = vmatpush1.msra.mxu0 0.0
  %93 = vmatprep.subr.mxu0 0.0
  %94 = vmatpush1.msra.mxu0 0.0
  %95 = vmatprep.subr.mxu0 0.0
  %96 = vmatpush1.msra.mxu0 0.0
  %97 = vmatprep.subr.mxu0 0.0
  %98 = vmatpush1.msra.mxu0 0.0
  %99 = vmatprep.subr.mxu0 0.0
  %100 = vmatpush1.msra.mxu0 0.0
  %101 = vmatprep.subr.mxu0 0.0
  %102 = vmatpush1.msra.mxu0 0.0
  %103 = vmatprep.subr.mxu0 0.0
  %104 = vmatpush1.msra.mxu0 0.0
  %105 = vmatprep.subr.mxu0 0.0
  %106 = vmatpush1.msra.mxu0 0.0
  %107 = vmatprep.subr.mxu0 0.0
  %108 = vmatpush1.msra.mxu0 0.0
  %109 = vmatprep.subr.mxu0 0.0
  %110 = vmatpush1.msra.mxu0 0.0
  %111 = vmatprep.subr.mxu0 0.0
  %112 = vmatpush1.msra.mxu0 0.0
  %113 = vmatprep.subr.mxu0 0.0
  %114 = vmatpush1.msra.mxu0 0.0
  %115 = vmatprep.subr.mxu0 0.0
  %116 = vmatpush1.msra.mxu0 0.0
  %117 = vmatprep.subr.mxu0 0.0
  %118 = vmatpush1.msra.mxu0 0.0
  %119 = vmatprep.mubr.f32.mxu0 0.0
  %120 = vmatmul.mubr.f32.gmra.mrb[0].mxu0 %v46
  %v121 = vpop.f32.mrb[0].mxu0
  %v122 = vadd.f32 %v37, %v121
  %v123 = vpop.f32.mrb[0].mxu0
  %124 = vmatprep.mubr.f32.mxu0 0.0
  %125 = vmatmul.mubr.f32.gmra.mrb[0].mxu0 %v49
  %v126 = vpop.f32.mrb[0].mxu0
  %v127 = vadd.f32 %v42, %v126
  %v128 = vpop.f32.mrb[0].mxu0
  %129 = vdwg.mxu0
  %v130 = vmax.f32 %v122, 0.0
  %v131 = vmax.f32 %v127, 0.0
  %v132 = vld [vmem:[%s3] sm:$0xff]
  %v133 = vld [vmem:[%s4] sm:$0xff]
  %135 = vset.pattern.permute.xlu0 0
  %136 = vperm.xlu0 %135, %v133
  %v137 = vpop.permute.xlu0 %136
  %vm139 = vcmask 130048
  %v141 = vsel %vm139, %v132, 0
  %143 = vmatprep.subr.mxu0 0.0
  %144 = vmatpush1.msra.mxu0 %v130
  %145 = vmatprep.subr.mxu0 0.0
  %146 = vmatpush1.msra.mxu0 %v131
  %147 = vmatprep.subr.mxu0 0.0
  %148 = vmatpush1.msra.mxu0 0.0
  %149 = vmatprep.subr.mxu0 0.0
  %150 = vmatpush1.msra.mxu0 0.0
  %151 = vmatprep.subr.mxu0 0.0
  %152 = vmatpush1.msra.mxu0 0.0
  %153 = vmatprep.subr.mxu0 0.0
  %154 = vmatpush1.msra.mxu0 0.0
  %155 = vmatprep.subr.mxu0 0.0
  %156 = vmatpush1.msra.mxu0 0.0
  %157 = vmatprep.subr.mxu0 0.0
  %158 = vmatpush1.msra.mxu0 0.0
  %159 = vmatprep.subr.mxu0 0.0
  %160 = vmatpush1.msra.mxu0 0.0
  %161 = vmatprep.subr.mxu0 0.0
  %162 = vmatpush1.msra.mxu0 0.0
  %163 = vmatprep.subr.mxu0 0.0
  %164 = vmatpush1.msra.mxu0 0.0
  %165 = vmatprep.subr.mxu0 0.0
  %166 = vmatpush1.msra.mxu0 0.0
  %167 = vmatprep.subr.mxu0 0.0
  %168 = vmatpush1.msra.mxu0 0.0
  %169 = vmatprep.subr.mxu0 0.0
  %170 = vmatpush1.msra.mxu0 0.0
  %171 = vmatprep.subr.mxu0 0.0
  %172 = vmatpush1.msra.mxu0 0.0
  %173 = vmatprep.subr.mxu0 0.0
  %174 = vmatpush1.msra.mxu0 0.0
  %175 = vmatprep.subr.mxu0 0.0
  %176 = vmatpush1.msra.mxu0 0.0
  %177 = vmatprep.subr.mxu0 0.0
  %178 = vmatpush1.msra.mxu0 0.0
  %179 = vmatprep.subr.mxu0 0.0
  %180 = vmatpush1.msra.mxu0 0.0
  %181 = vmatprep.subr.mxu0 0.0
  %182 = vmatpush1.msra.mxu0 0.0
  %183 = vmatprep.subr.mxu0 0.0
  %184 = vmatpush1.msra.mxu0 0.0
  %185 = vmatprep.subr.mxu0 0.0
  %186 = vmatpush1.msra.mxu0 0.0
  %187 = vmatprep.subr.mxu0 0.0
  %188 = vmatpush1.msra.mxu0 0.0
  %189 = vmatprep.subr.mxu0 0.0
  %190 = vmatpush1.msra.mxu0 0.0
  %191 = vmatprep.subr.mxu0 0.0
  %192 = vmatpush1.msra.mxu0 0.0
  %193 = vmatprep.subr.mxu0 0.0
  %194 = vmatpush1.msra.mxu0 0.0
  %195 = vmatprep.subr.mxu0 0.0
  %196 = vmatpush1.msra.mxu0 0.0
  %197 = vmatprep.subr.mxu0 0.0
  %198 = vmatpush1.msra.mxu0 0.0
  %199 = vmatprep.subr.mxu0 0.0
  %200 = vmatpush1.msra.mxu0 0.0
  %201 = vmatprep.subr.mxu0 0.0
  %202 = vmatpush1.msra.mxu0 0.0
  %203 = vmatprep.subr.mxu0 0.0
  %204 = vmatpush1.msra.mxu0 0.0
  %205 = vmatprep.subr.mxu0 0.0
  %206 = vmatpush1.msra.mxu0 0.0
  %207 = vmatprep.mubr.f32.mxu0 0.0
  %208 = vmatmul.mubr.f32.gmra.mrb[0].mxu0 %v141
  %v209 = vpop.f32.mrb[0].mxu0
  %v210 = vadd.f32 %v137, %v209
  %v211 = vpop.f32.mrb[0].mxu0
  %212 = vdwg.mxu0
  %v213 = vmax.f32 %v210, 0.0
  %v214 = vld [vmem:[%s5] sm:$0x1]
  %v215 = vld [vmem:[#allocation2] sm:$0x1]
  %217 = vset.pattern.permute.xlu0 0
  %218 = vperm.xlu0 %217, %v215
  %v219 = vpop.permute.xlu0 %218
  %v221 = vlaneseq
  %v222 = vshrl.u32 %v221, 7
  %v223 = vsub.s32 0, %v222
  %v224 = vrot.slane %v219, %v223
  %vm225 = vcmask 64512
  %v227 = vsel %vm225, %v214, 0
  %229 = vmatprep.subr.mxu0 0.0
  %230 = vmatpush1.msra.mxu0 %v213
  %231 = vmatprep.subr.mxu0 0.0
  %232 = vmatpush1.msra.mxu0 0.0
  %233 = vmatprep.subr.mxu0 0.0
  %234 = vmatpush1.msra.mxu0 0.0
  %235 = vmatprep.subr.mxu0 0.0
  %236 = vmatpush1.msra.mxu0 0.0
  %237 = vmatprep.subr.mxu0 0.0
  %238 = vmatpush1.msra.mxu0 0.0
  %239 = vmatprep.subr.mxu0 0.0
  %240 = vmatpush1.msra.mxu0 0.0
  %241 = vmatprep.subr.mxu0 0.0
  %242 = vmatpush1.msra.mxu0 0.0
  %243 = vmatprep.subr.mxu0 0.0
  %244 = vmatpush1.msra.mxu0 0.0
  %245 = vmatprep.subr.mxu0 0.0
  %246 = vmatpush1.msra.mxu0 0.0
  %247 = vmatprep.subr.mxu0 0.0
  %248 = vmatpush1.msra.mxu0 0.0
  %249 = vmatprep.subr.mxu0 0.0
  %250 = vmatpush1.msra.mxu0 0.0
  %251 = vmatprep.subr.mxu0 0.0
  %252 = vmatpush1.msra.mxu0 0.0
  %253 = vmatprep.subr.mxu0 0.0
  %254 = vmatpush1.msra.mxu0 0.0
  %255 = vmatprep.subr.mxu0 0.0
  %256 = vmatpush1.msra.mxu0 0.0
  %257 = vmatprep.subr.mxu0 0.0
  %258 = vmatpush1.msra.mxu0 0.0
  %259 = vmatprep.subr.mxu0 0.0
  %260 = vmatpush1.msra.mxu0 0.0
  %261 = vmatprep.subr.mxu0 0.0
  %262 = vmatpush1.msra.mxu0 0.0
  %263 = vmatprep.subr.mxu0 0.0
  %264 = vmatpush1.msra.mxu0 0.0
  %265 = vmatprep.subr.mxu0 0.0
  %266 = vmatpush1.msra.mxu0 0.0
  %267 = vmatprep.subr.mxu0 0.0
  %268 = vmatpush1.msra.mxu0 0.0
  %269 = vmatprep.subr.mxu0 0.0
  %270 = vmatpush1.msra.mxu0 0.0
  %271 = vmatprep.subr.mxu0 0.0
  %272 = vmatpush1.msra.mxu0 0.0
  %273 = vmatprep.subr.mxu0 0.0
  %274 = vmatpush1.msra.mxu0 0.0
  %275 = vmatprep.subr.mxu0 0.0
  %276 = vmatpush1.msra.mxu0 0.0
  %277 = vmatprep.subr.mxu0 0.0
  %278 = vmatpush1.msra.mxu0 0.0
  %279 = vmatprep.subr.mxu0 0.0
  %280 = vmatpush1.msra.mxu0 0.0
  %281 = vmatprep.subr.mxu0 0.0
  %282 = vmatpush1.msra.mxu0 0.0
  %283 = vmatprep.subr.mxu0 0.0
  %284 = vmatpush1.msra.mxu0 0.0
  %285 = vmatprep.subr.mxu0 0.0
  %286 = vmatpush1.msra.mxu0 0.0
  %287 = vmatprep.subr.mxu0 0.0
  %288 = vmatpush1.msra.mxu0 0.0
  %289 = vmatprep.subr.mxu0 0.0
  %290 = vmatpush1.msra.mxu0 0.0
  %291 = vmatprep.subr.mxu0 0.0
  %292 = vmatpush1.msra.mxu0 0.0
  %293 = vmatprep.mubr.f32.mxu0 0.0
  %294 = vmatmul.mubr.f32.gmra.mrb[0].mxu0 %v227
  %v295 = vpop.f32.mrb[0].mxu0
  %v296 = vadd.f32 %v224, %v295
  %v297 = vpop.f32.mrb[0].mxu0
  %298 = vdwg.mxu0
  %v299 = vxor.u32 %v296, 2147483648
  %v300 = vmul.f32 %v299, 1.442695
  %v301 = vpow.pop %v300
  %v302 = vadd.f32 %v301, 1.0
  %v303 = vrcp.pop %v302
  %v304 = vmul.f32 1.0, %v303
  %305 = vst [vmem:[%s7] sm:$0x1] %v304
  // Predicated region
  $region30: #{net_forward.1} parent=0 // pred_check
    _
  $region31: #{net_forward.1} parent=0 // pred_check_branch
    %307 = sbr.rel (0) target = $region33
  $region32: #{net_forward.1} parent=0 // pred_region
    _
  $region33: #{net_forward.1} parent=0 // pred_fallthru
    _
  // Predicated region
  $region34: #{net_forward.1} parent=0 // pred_check
    _
  $region35: #{net_forward.1} parent=0 // pred_check_branch
    %309 = sbr.rel (0) target = $region37
  $region36: #{net_forward.1} parent=0 // pred_region
    _
  $region37: #{net_forward.1} parent=0 // pred_fallthru
    _

</llo_original>
